<compile_context>
chip_gen: v7x
topology: tpu7x:2x2x1
jax: 0.10.0
libtpu: 0.0.40
codegen_flags: <defaults>
</compile_context>

<pallas_src>
import jax
import jax.numpy as jnp
from jax.experimental import pallas as pl
from jax.experimental.pallas import tpu as pltpu


def _round_up(x, m):
    return ((x + m - 1) // m) * m


def _sigmoid(z):
    # Exact sigmoid: exp goes to the EUP slot, exact divide.  HBM-bound kernel
    # => the exact reciprocal is hidden for free.
    return 1.0 / (1.0 + jnp.exp(-z))


def _se_block_kernel(x_ref, w1_ref, b1_ref, w2_ref, b2_ref, o_ref):
    x = x_ref[...]                                            # (tm, L) lane-dense
    # Squeeze/excite MLP.  Block-diagonal packed weights make the per-row
    # semantics identical to the unpacked x @ w1 / h @ w2.
    h = jnp.dot(x, w1_ref[...], preferred_element_type=jnp.float32) + b1_ref[...]
    h = h * _sigmoid(h)                                       # SiLU
    att = jnp.dot(h, w2_ref[...], preferred_element_type=jnp.float32) + b2_ref[...]
    att = _sigmoid(att)
    o_ref[...] = (x * att).astype(o_ref.dtype)                # gate


def se_block(x, w1, b1, w2, b2, *, tm=None):
    """SEBlock forward.

    x:  (B, H) float32
    w1: (H, R)   b1: (R,)     (first Linear, stored (in, out))
    w2: (R, H)   b2: (H,)     (second Linear, stored (in, out))
    """
    B, H = x.shape
    R = w1.shape[1]
    orig_dtype = x.dtype

    # ---- lane packing: put `pack` batch rows side by side in the 128 lanes.
    pack = (128 // H) if (H < 128 and 128 % H == 0) else 1
    L = pack * H            # packed lane width (128 for H=32)
    PR = pack * R           # packed bottleneck width (8 for H=32, R=2)

    # Block-diagonal weight packing (host-side, once).
    eye = jnp.eye(pack, dtype=w1.dtype)
    w1p = jnp.kron(eye, w1)                        # (L, PR)
    w2p = jnp.kron(eye, w2)                        # (PR, L)
    b1p = jnp.tile(b1, pack).reshape(1, PR)
    b2p = jnp.tile(b2, pack).reshape(1, L)

    # ---- batch padding / tile size (in packed 128-lane rows).
    b_pack = _round_up(B, pack)
    bp = b_pack // pack
    if tm is None:
        # 2048 packed rows -> 1 MiB per f32 buffer; sweep 2048-8192 per
        # generation (smaller end on v7x's 64 MiB VMEM).
        tm = 2048
    tm = min(tm, bp)
    if bp > 8:
        # Keep >= 2 grid steps so "parallel" can shard across both v7x TCs.
        tm = min(tm, _round_up(pl.cdiv(bp, 2), 8))
    tm = max(8, (tm // 8) * 8)                     # sublane alignment

    bp_final = _round_up(bp, tm)                   # grid divides evenly
    b_final = bp_final * pack
    if b_final != B:
        x = jnp.pad(x, ((0, b_final - B), (0, 0)))
    xp = x.reshape(bp_final, L)                    # free row-major reshape

    grid = (bp_final // tm,)

    x_spec = pl.BlockSpec((tm, L), lambda i: (i, 0))
    out_spec = pl.BlockSpec((tm, L), lambda i: (i, 0))
    # Constant index maps: weights/biases are DMA'd once and stay
    # VMEM-resident across all batch tiles.
    w1_spec = pl.BlockSpec((L, PR), lambda i: (0, 0))
    b1_spec = pl.BlockSpec((1, PR), lambda i: (0, 0))
    w2_spec = pl.BlockSpec((PR, L), lambda i: (0, 0))
    b2_spec = pl.BlockSpec((1, L), lambda i: (0, 0))

    outp = pl.pallas_call(
        _se_block_kernel,
        out_shape=jax.ShapeDtypeStruct((bp_final, L), orig_dtype),
        grid_spec=pltpu.PrefetchScalarGridSpec(
            num_scalar_prefetch=0,
            grid=grid,
            in_specs=[x_spec, w1_spec, b1_spec, w2_spec, b2_spec],
            out_specs=out_spec,
        ),
        compiler_params=pltpu.CompilerParams(
            # Batch tiles are independent -> megacore-shard on v7x.
            dimension_semantics=("parallel",),
        ),
    )(xp, w1p, b1p, w2p, b2p)

    out = outp.reshape(b_final, H)
    return out[:B] if b_final != B else out


def se_block_ref(x, w1, b1, w2, b2):
    h = x @ w1 + b1
    h = h * jax.nn.sigmoid(h)
    att = jax.nn.sigmoid(h @ w2 + b2)
    return x * att


if __name__ == "__main__":
    # Module-consistent small shapes: hidden_dim=32, reduction=16 -> R=2.
    B, H, reduction = 64, 32, 16
    R = H // reduction

    key = jax.random.PRNGKey(0)
    kx, k1, k2, k3, k4 = jax.random.split(key, 5)

    x = jax.random.normal(kx, (B, H), dtype=jnp.float32)
    # Synthetic nn.Linear params, stored (in, out).
    w1 = jax.random.normal(k1, (H, R), dtype=jnp.float32) * 0.1
    b1 = jax.random.normal(k2, (R,), dtype=jnp.float32) * 0.1
    w2 = jax.random.normal(k3, (R, H), dtype=jnp.float32) * 0.1
    b2 = jax.random.normal(k4, (H,), dtype=jnp.float32) * 0.1

    # B=64 -> 16 packed rows, tm=8 -> grid=(2,): exercises the tiled path.
    out = jax.block_until_ready(se_block(x, w1, b1, w2, b2))
    ref = jax.block_until_ready(se_block_ref(x, w1, b1, w2, b2))

    assert out.shape == (B, H)
    assert jnp.allclose(out, ref, atol=1e-4, rtol=1e-4), "mismatch vs reference"

    print("KERNEL_OK")
</pallas_src>

<mosaic_0001>
module attributes {stable_mosaic.version = 11 : i64} {
  func.func @_se_block_kernel(%arg0: i32, %arg1: memref<8x128xf32, #tpu.memory_space<vmem>>, %arg2: memref<128x8xf32, #tpu.memory_space<vmem>>, %arg3: memref<1x8xf32, #tpu.memory_space<vmem>>, %arg4: memref<8x128xf32, #tpu.memory_space<vmem>>, %arg5: memref<1x128xf32, #tpu.memory_space<vmem>>, %arg6: memref<8x128xf32, #tpu.memory_space<vmem>>) attributes {dimension_semantics = [#tpu.dimension_semantics<parallel>], iteration_bounds = array<i64: 2>, scalar_prefetch = 0 : i64, scratch_operands = 0 : i64, tpu.core_type = #tpu.core_type<tc>, window_params = [{transform_indices = @transform_0, window_bounds = array<i64: 8, 128>}, {pipeline_mode = #tpu.pipeline_mode<synchronous>, transform_indices = @transform_1, window_bounds = array<i64: 128, 8>}, {pipeline_mode = #tpu.pipeline_mode<synchronous>, transform_indices = @transform_2, window_bounds = array<i64: 1, 8>}, {pipeline_mode = #tpu.pipeline_mode<synchronous>, transform_indices = @transform_3, window_bounds = array<i64: 8, 128>}, {pipeline_mode = #tpu.pipeline_mode<synchronous>, transform_indices = @transform_4, window_bounds = array<i64: 1, 128>}, {transform_indices = @transform_5, window_bounds = array<i64: 8, 128>}]} {
    %c0 = arith.constant 0 : index
    %c0_0 = arith.constant 0 : index
    %0 = vector.load %arg1[%c0, %c0_0] : memref<8x128xf32, #tpu.memory_space<vmem>>, vector<8x128xf32>
    %c0_1 = arith.constant 0 : index
    %c0_2 = arith.constant 0 : index
    %1 = vector.load %arg2[%c0_1, %c0_2] : memref<128x8xf32, #tpu.memory_space<vmem>>, vector<128x8xf32>
    %cst = arith.constant dense<0.000000e+00> : vector<8x8xf32>
    %2 = tpu.matmul %0, %1, %cst {dimension_numbers = #tpu.dot_dimension_numbers<[1], [0], [0], [1], [0, 0, 1, 1], [], []>} : vector<8x128xf32>, vector<128x8xf32>, vector<8x8xf32> -> vector<8x8xf32>
    %c0_3 = arith.constant 0 : index
    %c0_4 = arith.constant 0 : index
    %3 = vector.load %arg3[%c0_3, %c0_4] : memref<1x8xf32, #tpu.memory_space<vmem>>, vector<1x8xf32>
    %4 = vector.broadcast %3 : vector<1x8xf32> to vector<8x8xf32>
    %5 = arith.addf %2, %4 : vector<8x8xf32>
    %cst_5 = arith.constant 0.000000e+00 : f32
    %6 = vector.broadcast %cst_5 : f32 to vector<8x8xf32>
    %7 = arith.subf %6, %5 : vector<8x8xf32>
    %8 = math.exp %7 : vector<8x8xf32>
    %cst_6 = arith.constant 1.000000e+00 : f32
    %9 = vector.broadcast %cst_6 : f32 to vector<8x8xf32>
    %10 = arith.addf %9, %8 : vector<8x8xf32>
    %cst_7 = arith.constant 1.000000e+00 : f32
    %11 = vector.broadcast %cst_7 : f32 to vector<8x8xf32>
    %12 = arith.divf %11, %10 : vector<8x8xf32>
    %13 = arith.mulf %5, %12 : vector<8x8xf32>
    %c0_8 = arith.constant 0 : index
    %c0_9 = arith.constant 0 : index
    %14 = vector.load %arg4[%c0_8, %c0_9] : memref<8x128xf32, #tpu.memory_space<vmem>>, vector<8x128xf32>
    %cst_10 = arith.constant dense<0.000000e+00> : vector<8x128xf32>
    %15 = tpu.matmul %13, %14, %cst_10 {dimension_numbers = #tpu.dot_dimension_numbers<[1], [0], [0], [1], [0, 0, 1, 1], [], []>} : vector<8x8xf32>, vector<8x128xf32>, vector<8x128xf32> -> vector<8x128xf32>
    %c0_11 = arith.constant 0 : index
    %c0_12 = arith.constant 0 : index
    %16 = vector.load %arg5[%c0_11, %c0_12] : memref<1x128xf32, #tpu.memory_space<vmem>>, vector<1x128xf32>
    %17 = vector.broadcast %16 : vector<1x128xf32> to vector<8x128xf32>
    %18 = arith.addf %15, %17 : vector<8x128xf32>
    %cst_13 = arith.constant 0.000000e+00 : f32
    %19 = vector.broadcast %cst_13 : f32 to vector<8x128xf32>
    %20 = arith.subf %19, %18 : vector<8x128xf32>
    %21 = math.exp %20 : vector<8x128xf32>
    %cst_14 = arith.constant 1.000000e+00 : f32
    %22 = vector.broadcast %cst_14 : f32 to vector<8x128xf32>
    %23 = arith.addf %22, %21 : vector<8x128xf32>
    %cst_15 = arith.constant 1.000000e+00 : f32
    %24 = vector.broadcast %cst_15 : f32 to vector<8x128xf32>
    %25 = arith.divf %24, %23 : vector<8x128xf32>
    %26 = arith.mulf %0, %25 : vector<8x128xf32>
    %c0_16 = arith.constant 0 : index
    %c0_17 = arith.constant 0 : index
    %27 = vector.load %arg6[%c0_16, %c0_17] : memref<8x128xf32, #tpu.memory_space<vmem>>, vector<8x128xf32>
    tpu.vector_store %arg6[%c0_16, %c0_17], %26 {strides = array<i32>} : memref<8x128xf32, #tpu.memory_space<vmem>>, vector<8x128xf32>,
    return
  }
  func.func @transform_0(%arg0: i32) -> (i32, i32) {
    %c0_i32 = arith.constant 0 : i32
    %c0_i32_0 = arith.constant 0 : i32
    return %arg0, %c0_i32 : i32, i32
  }
  func.func @transform_1(%arg0: i32) -> (i32, i32) {
    %c0_i32 = arith.constant 0 : i32
    %c0_i32_0 = arith.constant 0 : i32
    %c0_i32_1 = arith.constant 0 : i32
    return %c0_i32, %c0_i32_0 : i32, i32
  }
  func.func @transform_2(%arg0: i32) -> (i32, i32) {
    %c0_i32 = arith.constant 0 : i32
    %c0_i32_0 = arith.constant 0 : i32
    %c0_i32_1 = arith.constant 0 : i32
    return %c0_i32, %c0_i32_0 : i32, i32
  }
  func.func @transform_3(%arg0: i32) -> (i32, i32) {
    %c0_i32 = arith.constant 0 : i32
    %c0_i32_0 = arith.constant 0 : i32
    %c0_i32_1 = arith.constant 0 : i32
    return %c0_i32, %c0_i32_0 : i32, i32
  }
  func.func @transform_4(%arg0: i32) -> (i32, i32) {
    %c0_i32 = arith.constant 0 : i32
    %c0_i32_0 = arith.constant 0 : i32
    %c0_i32_1 = arith.constant 0 : i32
    return %c0_i32, %c0_i32_0 : i32, i32
  }
  func.func @transform_5(%arg0: i32) -> (i32, i32) {
    %c0_i32 = arith.constant 0 : i32
    %c0_i32_0 = arith.constant 0 : i32
    return %arg0, %c0_i32 : i32, i32
  }
}

</mosaic_0001>

<llo_original>
// kernel: tpu_custom_call.1
$region0: #{tpu_custom_call.1}
  #allocation0 [shape = 'u32[]', space=smem, size = 0x4, offset = 0x4, fixed_abs, tag = 'smem constant byte address 0x4 - core index']
  #allocation1 [shape = 'u32[144,128]{1,0:T(1,128)}', space=vmem, size = 0x12000, scoped, tag = 'internal scratch']
  %s0 = inlined_call_operand.vmem [shape: f32[16,128], index: 0, kind: input, shape index: {}]
  %s1 = inlined_call_operand.vmem [shape: f32[128,8], index: 1, kind: input, shape index: {}]
  %s2 = inlined_call_operand.vmem [shape: f32[1,8], index: 2, kind: input, shape index: {}]
  %s3 = inlined_call_operand.vmem [shape: f32[8,128], index: 3, kind: input, shape index: {}]
  %s4 = inlined_call_operand.vmem [shape: f32[1,128], index: 4, kind: input, shape index: {}]
  %s5 = inlined_call_operand.hbm [shape: f32[16,128], index: 5, kind: output, shape index: {}]
  %s6 = sld [smem:[#allocation0]]
  $region53: #{tpu_custom_call.1} parent=0
    _
  %s8 = ssub.s32 1, %s6
  %s9 = scalar_select 0, %s8, %s6
  $region1: #{tpu_custom_call.1} parent=0
    #allocation2 [shape = 'u8[8192]{0}', space=vmem, size = 0x2000, scoped, tag = 'output window, operand 0']
    #allocation3 [shape = 's32[2]{0}', space=sflag, size = 0x8, scoped, tag = 'scoped memory for tpu_custom_call.1']
    %10 = vsyncpa [#allocation3], 0
    %s11 = scalar_lea.sflag [#allocation3], 1
    %12 = vsyncpa %s11, 0
    loop: start=0, step=1, limit=4
    $region2: #{tpu_custom_call.1} parent=1 // loop_pre_header
      _
    $region3: #{tpu_custom_call.1} parent=1 // loop_header
      %s14 = sphi 0, %s18
      %p15 = scmp.ge.s32.totalorder %s14, 4
      %s24 = sphi 0, %s26
      %s27 = sphi 0, %s24
      %s28 = sphi 0, %s27
      %s44 = sphi 0, %s28
      %s48 = sphi 0, %s48
      %s50 = sphi 0, %s48
      %s51 = sphi 0, %s50
      %s65 = sphi 0, %s51
      %s69 = sphi 0, %s69
      %s71 = sphi 0, %s69
      %s72 = sphi 0, %s71
      %s86 = sphi 0, %s72
      %s90 = sphi 0, %s90
      %s92 = sphi 0, %s90
      %s93 = sphi 0, %s92
      %s107 = sphi 0, %s93
      %s111 = sphi 0, %s111
      %s113 = sphi 0, %s111
      %s114 = sphi 0, %s113
      %s128 = sphi 0, %s114
      %s134 = sphi 0, %s136
      %s137 = sphi 0, %s134
      %s138 = sphi 0, %s137
      %s154 = sphi 0, %s138
    $region4: #{tpu_custom_call.1} parent=1 // loop_header_branch
      %17 = sbr.rel (%p15) target = $region8
    $region5: #{tpu_custom_call.1} parent=1 // loop_body
      %s19 = ssub.s32 %s14, 1
      %s20 = ssub.s32 %s14, 2
      %s21 = sadd.s32 %s14, 1
      %s22 = ssub.s32 %s14, %s21
      %p23 = scmp.eq.s32.totalorder %s22, 0
      %s25 = sadd.s32 %s24, 1
      %s26 = scalar_select %p23, %s24, %s25
      %p29 = pneg %p23
      %p30 = scmp.eq.s32.totalorder %s14, 1
      %p31 = por %p29, %p30
      %p32 = scmp.ne.s32.totalorder %s24, %s27
      %p33 = scmp.eq.s32.totalorder %s14, 0
      %p34 = por %p32, %p33
      %p35 = scmp.ne.s32.totalorder %s24, %s27
      %p36 = scmp.eq.s32.totalorder %s19, 1
      %p37 = por %p35, %p36
      %p38 = scmp.ne.s32.totalorder %s27, %s28
      %p39 = scmp.eq.s32.totalorder %s19, 0
      %p40 = por %p38, %p39
      %p41 = scmp.ne.s32.totalorder %s27, %s28
      %p42 = scmp.eq.s32.totalorder %s20, 1
      %p43 = por %p41, %p42
      %p45 = scmp.ne.s32.totalorder %s28, %s44
      %p46 = scmp.eq.s32.totalorder %s20, 0
      %p47 = por %p45, %p46
      %s49 = sadd.s32 %s48, 1
      %p52 = scmp.eq.s32.totalorder %s14, 1
      %p53 = scmp.ne.s32.totalorder %s48, %s50
      %p54 = scmp.eq.s32.totalorder %s14, 0
      %p55 = por %p53, %p54
      %p56 = scmp.ne.s32.totalorder %s48, %s50
      %p57 = scmp.eq.s32.totalorder %s19, 1
      %p58 = por %p56, %p57
      %p59 = scmp.ne.s32.totalorder %s50, %s51
      %p60 = scmp.eq.s32.totalorder %s19, 0
      %p61 = por %p59, %p60
      %p62 = scmp.ne.s32.totalorder %s50, %s51
      %p63 = scmp.eq.s32.totalorder %s20, 1
      %p64 = por %p62, %p63
      %p66 = scmp.ne.s32.totalorder %s51, %s65
      %p67 = scmp.eq.s32.totalorder %s20, 0
      %p68 = por %p66, %p67
      %s70 = sadd.s32 %s69, 1
      %p73 = scmp.eq.s32.totalorder %s14, 1
      %p74 = scmp.ne.s32.totalorder %s69, %s71
      %p75 = scmp.eq.s32.totalorder %s14, 0
      %p76 = por %p74, %p75
      %p77 = scmp.ne.s32.totalorder %s69, %s71
      %p78 = scmp.eq.s32.totalorder %s19, 1
      %p79 = por %p77, %p78
      %p80 = scmp.ne.s32.totalorder %s71, %s72
      %p81 = scmp.eq.s32.totalorder %s19, 0
      %p82 = por %p80, %p81
      %p83 = scmp.ne.s32.totalorder %s71, %s72
      %p84 = scmp.eq.s32.totalorder %s20, 1
      %p85 = por %p83, %p84
      %p87 = scmp.ne.s32.totalorder %s72, %s86
      %p88 = scmp.eq.s32.totalorder %s20, 0
      %p89 = por %p87, %p88
      %s91 = sadd.s32 %s90, 1
      %p94 = scmp.eq.s32.totalorder %s14, 1
      %p95 = scmp.ne.s32.totalorder %s90, %s92
      %p96 = scmp.eq.s32.totalorder %s14, 0
      %p97 = por %p95, %p96
      %p98 = scmp.ne.s32.totalorder %s90, %s92
      %p99 = scmp.eq.s32.totalorder %s19, 1
      %p100 = por %p98, %p99
      %p101 = scmp.ne.s32.totalorder %s92, %s93
      %p102 = scmp.eq.s32.totalorder %s19, 0
      %p103 = por %p101, %p102
      %p104 = scmp.ne.s32.totalorder %s92, %s93
      %p105 = scmp.eq.s32.totalorder %s20, 1
      %p106 = por %p104, %p105
      %p108 = scmp.ne.s32.totalorder %s93, %s107
      %p109 = scmp.eq.s32.totalorder %s20, 0
      %p110 = por %p108, %p109
      %s112 = sadd.s32 %s111, 1
      %p115 = scmp.eq.s32.totalorder %s14, 1
      %p116 = scmp.ne.s32.totalorder %s111, %s113
      %p117 = scmp.eq.s32.totalorder %s14, 0
      %p118 = por %p116, %p117
      %p119 = scmp.ne.s32.totalorder %s111, %s113
      %p120 = scmp.eq.s32.totalorder %s19, 1
      %p121 = por %p119, %p120
      %p122 = scmp.ne.s32.totalorder %s113, %s114
      %p123 = scmp.eq.s32.totalorder %s19, 0
      %p124 = por %p122, %p123
      %p125 = scmp.ne.s32.totalorder %s113, %s114
      %p126 = scmp.eq.s32.totalorder %s20, 1
      %p127 = por %p125, %p126
      %p129 = scmp.ne.s32.totalorder %s114, %s128
      %p130 = scmp.eq.s32.totalorder %s20, 0
      %p131 = por %p129, %p130
      %s132 = ssub.s32 %s14, %s21
      %p133 = scmp.eq.s32.totalorder %s132, 0
      %s135 = sadd.s32 %s134, 1
      %s136 = scalar_select %p133, %s134, %s135
      %p139 = pneg %p133
      %p140 = scmp.eq.s32.totalorder %s14, 1
      %p141 = por %p139, %p140
      %p142 = scmp.ne.s32.totalorder %s134, %s137
      %p143 = scmp.eq.s32.totalorder %s14, 0
      %p144 = por %p142, %p143
      %p145 = scmp.ne.s32.totalorder %s134, %s137
      %p146 = scmp.eq.s32.totalorder %s19, 1
      %p147 = por %p145, %p146
      %p148 = scmp.ne.s32.totalorder %s137, %s138
      %p149 = scmp.eq.s32.totalorder %s19, 0
      %p150 = por %p148, %p149
      %p151 = scmp.ne.s32.totalorder %s137, %s138
      %p152 = scmp.eq.s32.totalorder %s20, 1
      %p153 = por %p151, %p152
      %p155 = scmp.ne.s32.totalorder %s138, %s154
      %p156 = scmp.eq.s32.totalorder %s20, 0
      %p157 = por %p155, %p156
      %p158 = scmp.le.s32.totalorder 1, %s14
      %p159 = scmp.lt.s32.totalorder %s14, 3
      %p160 = pnand %p158, %p159
      %p161 = pneg %p160
      // Predicated region
      $region9: #{tpu_custom_call.1} parent=5 // pred_check
        _
      $region10: #{tpu_custom_call.1} parent=5 // pred_check_branch
        %163 = sbr.rel (%p160) target = $region12
      $region11: #{tpu_custom_call.1} parent=5 // pred_region
        %s164 = ssub.s32 %s14, 1
        // Predicated region
        $region13: #{tpu_custom_call.1} parent=11 // pred_check
          %p165 = pneg %p61
        $region14: #{tpu_custom_call.1} parent=11 // pred_check_branch
          %167 = sbr.rel (%p165) target = $region16
        $region15: #{tpu_custom_call.1} parent=11 // pred_region
          _
        $region16: #{tpu_custom_call.1} parent=11 // pred_fallthru
          _
        // Predicated region
        $region17: #{tpu_custom_call.1} parent=11 // pred_check
          %p168 = pneg %p82
        $region18: #{tpu_custom_call.1} parent=11 // pred_check_branch
          %170 = sbr.rel (%p168) target = $region20
        $region19: #{tpu_custom_call.1} parent=11 // pred_region
          _
        $region20: #{tpu_custom_call.1} parent=11 // pred_fallthru
          _
        // Predicated region
        $region21: #{tpu_custom_call.1} parent=11 // pred_check
          %p171 = pneg %p103
        $region22: #{tpu_custom_call.1} parent=11 // pred_check_branch
          %173 = sbr.rel (%p171) target = $region24
        $region23: #{tpu_custom_call.1} parent=11 // pred_region
          _
        $region24: #{tpu_custom_call.1} parent=11 // pred_fallthru
          _
        // Predicated region
        $region25: #{tpu_custom_call.1} parent=11 // pred_check
          %p174 = pneg %p124
        $region26: #{tpu_custom_call.1} parent=11 // pred_check_branch
          %176 = sbr.rel (%p174) target = $region28
        $region27: #{tpu_custom_call.1} parent=11 // pred_region
          _
        $region28: #{tpu_custom_call.1} parent=11 // pred_fallthru
          _
      $region12: #{tpu_custom_call.1} parent=5 // pred_fallthru
        _
      %p177 = scmp.lt.s32.totalorder %s14, 2
      // Predicated region
      $region29: #{tpu_custom_call.1} parent=5 // pred_check
        %p178 = pneg %p177
      $region30: #{tpu_custom_call.1} parent=5 // pred_check_branch
        %180 = sbr.rel (%p178) target = $region32
      $region31: #{tpu_custom_call.1} parent=5 // pred_region
        // Predicated region
        $region33: #{tpu_custom_call.1} parent=31 // pred_check
          %p181 = pneg %p34
        $region34: #{tpu_custom_call.1} parent=31 // pred_check_branch
          %183 = sbr.rel (%p181) target = $region36
        $region35: #{tpu_custom_call.1} parent=31 // pred_region
          %p184 = scmp.lt.s32.totalorder %s14, 1
          %s185 = scalar_select %p184, %s14, 1
          %s186 = smul.addr %s185, 8
          %s187 = scalar_lea.vmem %s0, %s186
        $region36: #{tpu_custom_call.1} parent=31 // pred_fallthru
          _
      $region32: #{tpu_custom_call.1} parent=5 // pred_fallthru
        _
      %p188 = scmp.le.s32.totalorder 1, %s14
      %p189 = scmp.lt.s32.totalorder %s14, 3
      %p190 = pnand %p188, %p189
      %p191 = pneg %p190
      // Predicated region
      $region37: #{tpu_custom_call.1} parent=5 // pred_check
        _
      $region38: #{tpu_custom_call.1} parent=5 // pred_check_branch
        %193 = sbr.rel (%p190) target = $region40
      $region39: #{tpu_custom_call.1} parent=5 // pred_region
        %s194 = ssub.s32 %s14, 1
        %p195 = scmp.lt.s32.totalorder %s19, 1
        %s196 = scalar_select %p195, %s19, 1
        %s197 = smul.addr %s196, 8
        %s198 = scalar_lea.vmem %s0, %s197
        %p199 = pneg %p40
        %p200 = pneg %p37
        %p201 = pneg %p61
        %p202 = pneg %p58
        %p203 = pneg %p82
        %p204 = pneg %p79
        %p205 = pneg %p103
        %p206 = pneg %p100
        %p207 = pneg %p124
        %p208 = pneg %p121
        %p209 = pneg %p150
        %p210 = pneg %p147
        %s211 = sand.u32 %s137, 1
        %s212 = scalar_lea.sflag [#allocation3], %s211
        %s213 = sand.u32 %s137, 1
        %s214 = smul.addr %s213, 8
        %s215 = scalar_lea.vmem [#allocation2], %s214
        %p216 = scmp.lt.s32.totalorder %s19, 1
        %s217 = scalar_select %p216, %s19, 1
        %s218 = smul.addr %s217, 8
        %s219 = scalar_lea.vmem %s0, %s218
        %v220 = vld [vmem:[%s219] sm:$0xff]
        %v221 = vld [vmem:[%s1] sm:$0xff]
        %v222 = vld [vmem:[%s1 + $0x8] sm:$0xff]
        %v223 = vld [vmem:[%s1 + $0x10] sm:$0xff]
        %v224 = vld [vmem:[%s1 + $0x18] sm:$0xff]
        %v225 = vld [vmem:[%s1 + $0x20] sm:$0xff]
        %v226 = vld [vmem:[%s1 + $0x28] sm:$0xff]
        %v227 = vld [vmem:[%s1 + $0x30] sm:$0xff]
        %v228 = vld [vmem:[%s1 + $0x38] sm:$0xff]
        %v229 = vld [vmem:[%s1 + $0x40] sm:$0xff]
        %v230 = vld [vmem:[%s1 + $0x48] sm:$0xff]
        %v231 = vld [vmem:[%s1 + $0x50] sm:$0xff]
        %v232 = vld [vmem:[%s1 + $0x58] sm:$0xff]
        %v233 = vld [vmem:[%s1 + $0x60] sm:$0xff]
        %v234 = vld [vmem:[%s1 + $0x68] sm:$0xff]
        %v235 = vld [vmem:[%s1 + $0x70] sm:$0xff]
        %v236 = vld [vmem:[%s1 + $0x78] sm:$0xff]
        %v237 = vld [vmem:[%s2] sm:$0x1]
        %v239 = vlaneseq
        %v240 = vshrl.u32 %v239, 7
        %v241 = vsub.s32 0, %v240
        %v242 = vrot.slane %v237, %v241
        %244 = vmatprep.subr.mxu0 0.0
        %245 = vmatpush1.msra.mxu0 %v221
        %246 = vmatprep.subr.mxu0 0.0
        %247 = vmatpush1.msra.mxu0 %v222
        %248 = vmatprep.subr.mxu0 0.0
        %249 = vmatpush1.msra.mxu0 %v223
        %250 = vmatprep.subr.mxu0 0.0
        %251 = vmatpush1.msra.mxu0 %v224
        %252 = vmatprep.subr.mxu0 0.0
        %253 = vmatpush1.msra.mxu0 %v225
        %254 = vmatprep.subr.mxu0 0.0
        %255 = vmatpush1.msra.mxu0 %v226
        %256 = vmatprep.subr.mxu0 0.0
        %257 = vmatpush1.msra.mxu0 %v227
        %258 = vmatprep.subr.mxu0 0.0
        %259 = vmatpush1.msra.mxu0 %v228
        %260 = vmatprep.subr.mxu0 0.0
        %261 = vmatpush1.msra.mxu0 %v229
        %262 = vmatprep.subr.mxu0 0.0
        %263 = vmatpush1.msra.mxu0 %v230
        %264 = vmatprep.subr.mxu0 0.0
        %265 = vmatpush1.msra.mxu0 %v231
        %266 = vmatprep.subr.mxu0 0.0
        %267 = vmatpush1.msra.mxu0 %v232
        %268 = vmatprep.subr.mxu0 0.0
        %269 = vmatpush1.msra.mxu0 %v233
        %270 = vmatprep.subr.mxu0 0.0
        %271 = vmatpush1.msra.mxu0 %v234
        %272 = vmatprep.subr.mxu0 0.0
        %273 = vmatpush1.msra.mxu0 %v235
        %274 = vmatprep.subr.mxu0 0.0
        %275 = vmatpush1.msra.mxu0 %v236
        %276 = vmatprep.subr.mxu0 0.0
        %277 = vmatpush1.msra.mxu0 0.0
        %278 = vmatprep.subr.mxu0 0.0
        %279 = vmatpush1.msra.mxu0 0.0
        %280 = vmatprep.subr.mxu0 0.0
        %281 = vmatpush1.msra.mxu0 0.0
        %282 = vmatprep.subr.mxu0 0.0
        %283 = vmatpush1.msra.mxu0 0.0
        %284 = vmatprep.subr.mxu0 0.0
        %285 = vmatpush1.msra.mxu0 0.0
        %286 = vmatprep.subr.mxu0 0.0
        %287 = vmatpush1.msra.mxu0 0.0
        %288 = vmatprep.subr.mxu0 0.0
        %289 = vmatpush1.msra.mxu0 0.0
        %290 = vmatprep.subr.mxu0 0.0
        %291 = vmatpush1.msra.mxu0 0.0
        %292 = vmatprep.subr.mxu0 0.0
        %293 = vmatpush1.msra.mxu0 0.0
        %294 = vmatprep.subr.mxu0 0.0
        %295 = vmatpush1.msra.mxu0 0.0
        %296 = vmatprep.subr.mxu0 0.0
        %297 = vmatpush1.msra.mxu0 0.0
        %298 = vmatprep.subr.mxu0 0.0
        %299 = vmatpush1.msra.mxu0 0.0
        %300 = vmatprep.subr.mxu0 0.0
        %301 = vmatpush1.msra.mxu0 0.0
        %302 = vmatprep.subr.mxu0 0.0
        %303 = vmatpush1.msra.mxu0 0.0
        %304 = vmatprep.subr.mxu0 0.0
        %305 = vmatpush1.msra.mxu0 0.0
        %306 = vmatprep.subr.mxu0 0.0
        %307 = vmatpush1.msra.mxu0 0.0
        %308 = vmatprep.mubr.f32.mxu0 0.0
        %309 = vmatmul.mubr.f32.gmra.mrb[0].mxu0 %v220
        %v310 = vpop.f32.mrb[0].mxu0
        %v311 = vadd.f32 %v242, %v310
        %v312 = vpop.f32.mrb[0].mxu0
        %313 = vdwg.mxu0
        %v314 = vsub.f32 0.0, %v311
        %v315 = vmul.f32 %v314, 1.442695
        %v316 = vpow.pop %v315
        %v317 = vadd.f32 %v316, 1.0
        %v318 = vrcp.pop %v317
        %v319 = vmul.f32 1.0, %v318
        %v320 = vmul.f32 %v311, %v319
        %v321 = vld [vmem:[%s3] sm:$0xff]
        %v322 = vld [vmem:[%s4] sm:$0x1]
        %v324 = vlaneseq
        %v325 = vshrl.u32 %v324, 7
        %v326 = vsub.s32 0, %v325
        %v327 = vrot.slane %v322, %v326
        %vm329 = vcmask 64512
        %v331 = vsel %vm329, %v320, 0
        %333 = vmatprep.subr.mxu0 0.0
        %334 = vmatpush1.msra.mxu0 %v321
        %335 = vmatprep.subr.mxu0 0.0
        %336 = vmatpush1.msra.mxu0 0.0
        %337 = vmatprep.subr.mxu0 0.0
        %338 = vmatpush1.msra.mxu0 0.0
        %339 = vmatprep.subr.mxu0 0.0
        %340 = vmatpush1.msra.mxu0 0.0
        %341 = vmatprep.subr.mxu0 0.0
        %342 = vmatpush1.msra.mxu0 0.0
        %343 = vmatprep.subr.mxu0 0.0
        %344 = vmatpush1.msra.mxu0 0.0
        %345 = vmatprep.subr.mxu0 0.0
        %346 = vmatpush1.msra.mxu0 0.0
        %347 = vmatprep.subr.mxu0 0.0
        %348 = vmatpush1.msra.mxu0 0.0
        %349 = vmatprep.subr.mxu0 0.0
        %350 = vmatpush1.msra.mxu0 0.0
        %351 = vmatprep.subr.mxu0 0.0
        %352 = vmatpush1.msra.mxu0 0.0
        %353 = vmatprep.subr.mxu0 0.0
        %354 = vmatpush1.msra.mxu0 0.0
        %355 = vmatprep.subr.mxu0 0.0
        %356 = vmatpush1.msra.mxu0 0.0
        %357 = vmatprep.subr.mxu0 0.0
        %358 = vmatpush1.msra.mxu0 0.0
        %359 = vmatprep.subr.mxu0 0.0
        %360 = vmatpush1.msra.mxu0 0.0
        %361 = vmatprep.subr.mxu0 0.0
        %362 = vmatpush1.msra.mxu0 0.0
        %363 = vmatprep.subr.mxu0 0.0
        %364 = vmatpush1.msra.mxu0 0.0
        %365 = vmatprep.subr.mxu0 0.0
        %366 = vmatpush1.msra.mxu0 0.0
        %367 = vmatprep.subr.mxu0 0.0
        %368 = vmatpush1.msra.mxu0 0.0
        %369 = vmatprep.subr.mxu0 0.0
        %370 = vmatpush1.msra.mxu0 0.0
        %371 = vmatprep.subr.mxu0 0.0
        %372 = vmatpush1.msra.mxu0 0.0
        %373 = vmatprep.subr.mxu0 0.0
        %374 = vmatpush1.msra.mxu0 0.0
        %375 = vmatprep.subr.mxu0 0.0
        %376 = vmatpush1.msra.mxu0 0.0
        %377 = vmatprep.subr.mxu0 0.0
        %378 = vmatpush1.msra.mxu0 0.0
        %379 = vmatprep.subr.mxu0 0.0
        %380 = vmatpush1.msra.mxu0 0.0
        %381 = vmatprep.subr.mxu0 0.0
        %382 = vmatpush1.msra.mxu0 0.0
        %383 = vmatprep.subr.mxu0 0.0
        %384 = vmatpush1.msra.mxu0 0.0
        %385 = vmatprep.subr.mxu0 0.0
        %386 = vmatpush1.msra.mxu0 0.0
        %387 = vmatprep.subr.mxu0 0.0
        %388 = vmatpush1.msra.mxu0 0.0
        %389 = vmatprep.subr.mxu0 0.0
        %390 = vmatpush1.msra.mxu0 0.0
        %391 = vmatprep.subr.mxu0 0.0
        %392 = vmatpush1.msra.mxu0 0.0
        %393 = vmatprep.subr.mxu0 0.0
        %394 = vmatpush1.msra.mxu0 0.0
        %395 = vmatprep.subr.mxu0 0.0
        %396 = vmatpush1.msra.mxu0 0.0
        %397 = vmatprep.mubr.f32.mxu0 0.0
        %398 = vmatmul.mubr.f32.gmra.mrb[0].mxu0 %v331
        %v399 = vpop.f32.mrb[0].mxu0
        %v400 = vadd.f32 %v327, %v399
        %v401 = vpop.f32.mrb[0].mxu0
        %402 = vdwg.mxu0
        %v403 = vsub.f32 0.0, %v400
        %v404 = vmul.f32 %v403, 1.442695
        %v405 = vpow.pop %v404
        %v406 = vadd.f32 %v405, 1.0
        %v407 = vrcp.pop %v406
        %v408 = vmul.f32 1.0, %v407
        %v409 = vmul.f32 %v220, %v408
        %410 = vst [vmem:[%s215] sm:$0xff] %v409
        %s411 = sand.u32 %s137, 1
        %s412 = scalar_lea.sflag [#allocation3], %s411
        %s413 = sand.u32 %s137, 1
        %s414 = smul.addr %s413, 8
        %s415 = scalar_lea.vmem [#allocation2], %s414
        // Predicated region
        $region41: #{tpu_custom_call.1} parent=39 // pred_check
          %p416 = pneg %p147
        $region42: #{tpu_custom_call.1} parent=39 // pred_check_branch
          %418 = sbr.rel (%p416) target = $region44
        $region43: #{tpu_custom_call.1} parent=39 // pred_region
          %s420 = ssub.s32 128, 128
          %421 = vsyncadd %s412, %s420
          %s422 = smul.addr %s19, 128
          %s423 = scalar_lea.hbm %s5, %s422
          %s425 = sshll.u32 %s415, 4
          %s426 = int_to_ptr.vmem [resolvable:$true] %s425
          %428 = dma.vmem_to_hbm [thread:$0]  %s426, 128, %s423, %s412
        $region44: #{tpu_custom_call.1} parent=39 // pred_fallthru
          _
      $region40: #{tpu_custom_call.1} parent=5 // pred_fallthru
        _
      %p429 = scmp.le.s32.totalorder 2, %s14
      // Predicated region
      $region45: #{tpu_custom_call.1} parent=5 // pred_check
        %p430 = pneg %p429
      $region46: #{tpu_custom_call.1} parent=5 // pred_check_branch
        %432 = sbr.rel (%p430) target = $region48
      $region47: #{tpu_custom_call.1} parent=5 // pred_region
        %s433 = ssub.s32 %s14, 2
        // Predicated region
        $region49: #{tpu_custom_call.1} parent=47 // pred_check
          %p434 = pneg %p153
        $region50: #{tpu_custom_call.1} parent=47 // pred_check_branch
          %436 = sbr.rel (%p434) target = $region52
        $region51: #{tpu_custom_call.1} parent=47 // pred_region
          %s437 = sand.u32 %s138, 1
          %s438 = scalar_lea.sflag [#allocation3], %s437
          %s439 = sand.u32 %s138, 1
          %s440 = smul.addr %s439, 8
          %s441 = scalar_lea.vmem [#allocation2], %s440
          %442 = dma.done %s438, 128
        $region52: #{tpu_custom_call.1} parent=47 // pred_fallthru
          _
      $region48: #{tpu_custom_call.1} parent=5 // pred_fallthru
        _
    $region6: #{tpu_custom_call.1} parent=1 // loop_footer
      %s18 = sadd.s32 1, %s14
    $region7: #{tpu_custom_call.1} parent=1 // loop_footer_branch
      %13 = sbr.rel target = $region3
    $region8: #{tpu_custom_call.1} parent=1 // loop_exit
      _
    %443 = vsyncpa [#allocation3], 1
    %s444 = scalar_lea.sflag [#allocation3], 1
    %445 = vsyncpa %s444, 1

</llo_original>
